<compile_context>
chip_gen: v5e
topology: v5e:2x2
jax: 0.10.0
libtpu: 0.0.40
codegen_flags: <defaults>
</compile_context>

<pallas_src>
import jax
import jax.numpy as jnp
from jax.experimental import pallas as pl
from jax.experimental.pallas import tpu as pltpu

_LANE = 128  # TPU lane width


def dqn_kernel(x_ref, w1_ref, b1_ref, w2_ref, b2_ref, o_ref):
    # Fused Linear -> ReLU -> Linear on one batch tile.
    h = jnp.dot(x_ref[...], w1_ref[...], preferred_element_type=jnp.float32)
    h = jnp.maximum(h + b1_ref[...], 0.0)                      # bias + ReLU (VPU)
    o_ref[...] = (
        jnp.dot(h, w2_ref[...], preferred_element_type=jnp.float32) + b2_ref[...]
    )


def dqn_forward(x, w1, b1, w2, b2, *, block_b=128):
    """x: (B, F) float32; w1: (F, H); b1: (1, H); w2: (H, O); b2: (1, O).

    Returns (B, O) float32 = relu(x @ w1 + b1) @ w2 + b2.
    """
    B, F = x.shape
    H = w1.shape[1]
    O = w2.shape[1]

    # ---- Lane-dense output: pad second-layer output columns to 128 ----------
    o_pad = pl.cdiv(O, _LANE) * _LANE
    w2_p = jnp.zeros((H, o_pad), w2.dtype).at[:, :O].set(w2)
    b2_p = jnp.zeros((1, o_pad), b2.dtype).at[:, :O].set(b2)
    b1_2d = b1.reshape(1, H)

    # ---- Batch tile: fill MXU rows for large B, multiple of 8 for small B ---
    tb = min(block_b, max(8, pl.cdiv(B, 8) * 8))
    b_pad = pl.cdiv(B, tb) * tb
    if b_pad != B:
        x = jnp.zeros((b_pad, F), x.dtype).at[:B].set(x)

    grid = (b_pad // tb,)
    out = pl.pallas_call(
        dqn_kernel,
        out_shape=jax.ShapeDtypeStruct((b_pad, o_pad), jnp.float32),
        grid=grid,
        in_specs=[
            # Batch-tiled activations.
            pl.BlockSpec((tb, F), lambda i: (i, 0),
                         memory_space=pltpu.MemorySpace.VMEM),
            # Weights/biases: VMEM-resident across all batch tiles.
            pl.BlockSpec((F, H), lambda i: (0, 0),
                         memory_space=pltpu.MemorySpace.VMEM),
            pl.BlockSpec((1, H), lambda i: (0, 0),
                         memory_space=pltpu.MemorySpace.VMEM),
            pl.BlockSpec((H, o_pad), lambda i: (0, 0),
                         memory_space=pltpu.MemorySpace.VMEM),
            pl.BlockSpec((1, o_pad), lambda i: (0, 0),
                         memory_space=pltpu.MemorySpace.VMEM),
        ],
        out_specs=pl.BlockSpec((tb, o_pad), lambda i: (i, 0),
                               memory_space=pltpu.MemorySpace.VMEM),
        compiler_params=pltpu.CompilerParams(
            dimension_semantics=("parallel",)),
    )(x, w1, b1_2d, w2_p, b2_p)

    # Slice away batch padding and the zero-padded output columns.
    return out[:B, :O]


def init_params(key, linear_input_size, latent_space, outputs):
    """Deterministic init mimicking PyTorch's default U(-1/sqrt(fan_in), ...)."""
    k1, k2, k3, k4 = jax.random.split(key, 4)
    bound1 = 1.0 / (linear_input_size ** 0.5)
    bound2 = 1.0 / (latent_space ** 0.5)
    # Stored transposed relative to PyTorch's (out, in) layout.
    w1 = jax.random.uniform(k1, (linear_input_size, latent_space),
                            jnp.float32, -bound1, bound1)
    b1 = jax.random.uniform(k2, (1, latent_space), jnp.float32, -bound1, bound1)
    w2 = jax.random.uniform(k3, (latent_space, outputs),
                            jnp.float32, -bound2, bound2)
    b2 = jax.random.uniform(k4, (1, outputs), jnp.float32, -bound2, bound2)
    return w1, b1, w2, b2


if __name__ == "__main__":
    # Small shapes consistent with DQN(linear_input_size, latent_space, outputs).
    batch = 8
    linear_input_size = 64
    latent_space = 32
    outputs = 6

    key = jax.random.PRNGKey(0)
    kx, kp, kx2 = jax.random.split(key, 3)
    w1, b1, w2, b2 = init_params(kp, linear_input_size, latent_space, outputs)

    def ref_fn(x):
        return jnp.maximum(x @ w1 + b1, 0.0) @ w2 + b2

    # 1) Tiny batch (single tile, no batch padding).
    x = jax.random.normal(kx, (batch, linear_input_size), jnp.float32)
    out = jax.block_until_ready(dqn_forward(x, w1, b1, w2, b2))
    assert out.shape == (batch, outputs)
    assert jnp.allclose(out, ref_fn(x), atol=1e-5, rtol=1e-5)

    # 2) Larger, non-tile-aligned batch exercises the batch-tiled grid +
    #    padding path (260 -> 3 tiles of 128).
    big_batch = 260
    x2 = jax.random.normal(kx2, (big_batch, linear_input_size), jnp.float32)
    out2 = jax.block_until_ready(dqn_forward(x2, w1, b1, w2, b2))
    assert out2.shape == (big_batch, outputs)
    assert jnp.allclose(out2, ref_fn(x2), atol=1e-5, rtol=1e-5)

    print("KERNEL_OK")
</pallas_src>

<mosaic_0001>
module attributes {stable_mosaic.version = 11 : i64} {
  func.func @dqn_kernel(%arg0: i32, %arg1: memref<8x64xf32, #tpu.memory_space<vmem>>, %arg2: memref<64x32xf32, #tpu.memory_space<vmem>>, %arg3: memref<1x32xf32, #tpu.memory_space<vmem>>, %arg4: memref<32x128xf32, #tpu.memory_space<vmem>>, %arg5: memref<1x128xf32, #tpu.memory_space<vmem>>, %arg6: memref<8x128xf32, #tpu.memory_space<vmem>>) attributes {dimension_semantics = [#tpu.dimension_semantics<parallel>], iteration_bounds = array<i64: 1>, scalar_prefetch = 0 : i64, scratch_operands = 0 : i64, tpu.core_type = #tpu.core_type<tc>, window_params = [{transform_indices = @transform_0, window_bounds = array<i64: 8, 64>}, {pipeline_mode = #tpu.pipeline_mode<synchronous>, transform_indices = @transform_1, window_bounds = array<i64: 64, 32>}, {pipeline_mode = #tpu.pipeline_mode<synchronous>, transform_indices = @transform_2, window_bounds = array<i64: 1, 32>}, {pipeline_mode = #tpu.pipeline_mode<synchronous>, transform_indices = @transform_3, window_bounds = array<i64: 32, 128>}, {pipeline_mode = #tpu.pipeline_mode<synchronous>, transform_indices = @transform_4, window_bounds = array<i64: 1, 128>}, {transform_indices = @transform_5, window_bounds = array<i64: 8, 128>}]} {
    %c0 = arith.constant 0 : index
    %c0_0 = arith.constant 0 : index
    %0 = vector.load %arg1[%c0, %c0_0] : memref<8x64xf32, #tpu.memory_space<vmem>>, vector<8x64xf32>
    %c0_1 = arith.constant 0 : index
    %c0_2 = arith.constant 0 : index
    %1 = vector.load %arg2[%c0_1, %c0_2] : memref<64x32xf32, #tpu.memory_space<vmem>>, vector<64x32xf32>
    %cst = arith.constant dense<0.000000e+00> : vector<8x32xf32>
    %2 = tpu.matmul %0, %1, %cst {dimension_numbers = #tpu.dot_dimension_numbers<[1], [0], [0], [1], [0, 0, 1, 1], [], []>} : vector<8x64xf32>, vector<64x32xf32>, vector<8x32xf32> -> vector<8x32xf32>
    %c0_3 = arith.constant 0 : index
    %c0_4 = arith.constant 0 : index
    %3 = vector.load %arg3[%c0_3, %c0_4] : memref<1x32xf32, #tpu.memory_space<vmem>>, vector<1x32xf32>
    %4 = vector.broadcast %3 : vector<1x32xf32> to vector<8x32xf32>
    %5 = arith.addf %2, %4 : vector<8x32xf32>
    %cst_5 = arith.constant 0.000000e+00 : f32
    %6 = vector.broadcast %cst_5 : f32 to vector<8x32xf32>
    %7 = arith.maximumf %5, %6 : vector<8x32xf32>
    %c0_6 = arith.constant 0 : index
    %c0_7 = arith.constant 0 : index
    %8 = vector.load %arg4[%c0_6, %c0_7] : memref<32x128xf32, #tpu.memory_space<vmem>>, vector<32x128xf32>
    %cst_8 = arith.constant dense<0.000000e+00> : vector<8x128xf32>
    %9 = tpu.matmul %7, %8, %cst_8 {dimension_numbers = #tpu.dot_dimension_numbers<[1], [0], [0], [1], [0, 0, 1, 1], [], []>} : vector<8x32xf32>, vector<32x128xf32>, vector<8x128xf32> -> vector<8x128xf32>
    %c0_9 = arith.constant 0 : index
    %c0_10 = arith.constant 0 : index
    %10 = vector.load %arg5[%c0_9, %c0_10] : memref<1x128xf32, #tpu.memory_space<vmem>>, vector<1x128xf32>
    %11 = vector.broadcast %10 : vector<1x128xf32> to vector<8x128xf32>
    %12 = arith.addf %9, %11 : vector<8x128xf32>
    %c0_11 = arith.constant 0 : index
    %c0_12 = arith.constant 0 : index
    %13 = vector.load %arg6[%c0_11, %c0_12] : memref<8x128xf32, #tpu.memory_space<vmem>>, vector<8x128xf32>
    tpu.vector_store %arg6[%c0_11, %c0_12], %12 {strides = array<i32>} : memref<8x128xf32, #tpu.memory_space<vmem>>, vector<8x128xf32>,
    return
  }
  func.func @transform_0(%arg0: i32) -> (i32, i32) {
    %c0_i32 = arith.constant 0 : i32
    %c0_i32_0 = arith.constant 0 : i32
    return %arg0, %c0_i32 : i32, i32
  }
  func.func @transform_1(%arg0: i32) -> (i32, i32) {
    %c0_i32 = arith.constant 0 : i32
    %c0_i32_0 = arith.constant 0 : i32
    %c0_i32_1 = arith.constant 0 : i32
    return %c0_i32, %c0_i32_0 : i32, i32
  }
  func.func @transform_2(%arg0: i32) -> (i32, i32) {
    %c0_i32 = arith.constant 0 : i32
    %c0_i32_0 = arith.constant 0 : i32
    %c0_i32_1 = arith.constant 0 : i32
    return %c0_i32, %c0_i32_0 : i32, i32
  }
  func.func @transform_3(%arg0: i32) -> (i32, i32) {
    %c0_i32 = arith.constant 0 : i32
    %c0_i32_0 = arith.constant 0 : i32
    %c0_i32_1 = arith.constant 0 : i32
    return %c0_i32, %c0_i32_0 : i32, i32
  }
  func.func @transform_4(%arg0: i32) -> (i32, i32) {
    %c0_i32 = arith.constant 0 : i32
    %c0_i32_0 = arith.constant 0 : i32
    %c0_i32_1 = arith.constant 0 : i32
    return %c0_i32, %c0_i32_0 : i32, i32
  }
  func.func @transform_5(%arg0: i32) -> (i32, i32) {
    %c0_i32 = arith.constant 0 : i32
    %c0_i32_0 = arith.constant 0 : i32
    return %arg0, %c0_i32 : i32, i32
  }
}

</mosaic_0001>

<llo_original>
// kernel: tpu_custom_call.1
$region0: #{tpu_custom_call.1}
  #allocation0 [shape = 'u32[]', space=smem, size = 0x4, offset = 0x4, fixed_abs, tag = 'smem constant byte address 0x4 - core index']
  #allocation1 [shape = 'u32[72,128]{1,0:T(1,128)}', space=vmem, size = 0x9000, scoped, tag = 'internal scratch']
  %s0 = inlined_call_operand.vmem [shape: f32[8,64], index: 0, kind: input, shape index: {}]
  %s1 = inlined_call_operand.vmem [shape: f32[64,32], index: 1, kind: input, shape index: {}]
  %s2 = inlined_call_operand.vmem [shape: f32[1,32], index: 2, kind: input, shape index: {}]
  %s3 = inlined_call_operand.vmem [shape: f32[32,128], index: 3, kind: input, shape index: {}]
  %s4 = inlined_call_operand.vmem [shape: f32[1,128], index: 4, kind: input, shape index: {}]
  %s5 = inlined_call_operand.hbm [shape: f32[8,128], index: 5, kind: output, shape index: {}]
  %s6 = sld [smem:[#allocation0]]
  $region30: #{tpu_custom_call.1} parent=0
    _
  %s8 = ssub.s32 1, %s6
  %s9 = scalar_select 0, %s8, %s6
  $region1: #{tpu_custom_call.1} parent=0
    #allocation2 [shape = 'u8[4096]{0}', space=vmem, size = 0x1000, scoped, tag = 'output window, operand 0, single buffered']
    #allocation3 [shape = 's32[1]{0}', space=sflag, size = 0x4, scoped, tag = 'scoped memory for tpu_custom_call.1']
    %10 = vsyncpa [#allocation3], 0
    // Predicated region
    $region2: #{tpu_custom_call.1} parent=1 // pred_check
      _
    $region3: #{tpu_custom_call.1} parent=1 // pred_check_branch
      %12 = sbr.rel (0) target = $region5
    $region4: #{tpu_custom_call.1} parent=1 // pred_region
      _
    $region5: #{tpu_custom_call.1} parent=1 // pred_fallthru
      _
    // Predicated region
    $region6: #{tpu_custom_call.1} parent=1 // pred_check
      _
    $region7: #{tpu_custom_call.1} parent=1 // pred_check_branch
      %14 = sbr.rel (0) target = $region9
    $region8: #{tpu_custom_call.1} parent=1 // pred_region
      _
    $region9: #{tpu_custom_call.1} parent=1 // pred_fallthru
      _
    // Predicated region
    $region10: #{tpu_custom_call.1} parent=1 // pred_check
      _
    $region11: #{tpu_custom_call.1} parent=1 // pred_check_branch
      %16 = sbr.rel (0) target = $region13
    $region12: #{tpu_custom_call.1} parent=1 // pred_region
      _
    $region13: #{tpu_custom_call.1} parent=1 // pred_fallthru
      _
    // Predicated region
    $region14: #{tpu_custom_call.1} parent=1 // pred_check
      _
    $region15: #{tpu_custom_call.1} parent=1 // pred_check_branch
      %18 = sbr.rel (0) target = $region17
    $region16: #{tpu_custom_call.1} parent=1 // pred_region
      _
    $region17: #{tpu_custom_call.1} parent=1 // pred_fallthru
      _
    // Predicated region
    $region18: #{tpu_custom_call.1} parent=1 // pred_check
      _
    $region19: #{tpu_custom_call.1} parent=1 // pred_check_branch
      %20 = sbr.rel (0) target = $region21
    $region20: #{tpu_custom_call.1} parent=1 // pred_region
      _
    $region21: #{tpu_custom_call.1} parent=1 // pred_fallthru
      _
    %v21 = vld [vmem:[%s0] sm:$0xff]
    %v22 = vld [vmem:[%s1] sm:$0xff]
    %v23 = vld [vmem:[%s1 + $0x8] sm:$0xff]
    %v24 = vld [vmem:[%s1 + $0x10] sm:$0xff]
    %v25 = vld [vmem:[%s1 + $0x18] sm:$0xff]
    %v26 = vld [vmem:[%s1 + $0x20] sm:$0xff]
    %v27 = vld [vmem:[%s1 + $0x28] sm:$0xff]
    %v28 = vld [vmem:[%s1 + $0x30] sm:$0xff]
    %v29 = vld [vmem:[%s1 + $0x38] sm:$0xff]
    %v30 = vld [vmem:[%s2] sm:$0x1]
    %v32 = vperm.slane %v30, 0
    %vm34 = vcmask 523264
    %v36 = vsel %vm34, %v21, 0
    %38 = vmatpush.msra.mxu0 0.0
    %39 = vmatpush.msra.mxu0 0.0
    %40 = vmatpush.msra.mxu0 0.0
    %41 = vmatpush.msra.mxu0 0.0
    %42 = vmatpush.msra.mxu0 0.0
    %43 = vmatpush.msra.mxu0 0.0
    %44 = vmatpush.msra.mxu0 0.0
    %45 = vmatpush.msra.mxu0 0.0
    %46 = vmatpush.msra.mxu0 %v29
    %47 = vmatpush.msra.mxu0 %v28
    %48 = vmatpush.msra.mxu0 %v27
    %49 = vmatpush.msra.mxu0 %v26
    %50 = vmatpush.msra.mxu0 %v25
    %51 = vmatpush.msra.mxu0 %v24
    %52 = vmatpush.msra.mxu0 %v23
    %53 = vmatpush.msra.mxu0 %v22
    %54 = vmatmul.f32.gmra.mxu0 %v36
    %v55 = vpop.f32.mrf.mxu0
    %v56 = vadd.f32 %v32, %v55
    %57 = vdwg.mxu0
    %v58 = vmax.f32 %v56, 0.0
    %v59 = vld [vmem:[%s3] sm:$0xff]
    %v60 = vld [vmem:[%s3 + $0x8] sm:$0xff]
    %v61 = vld [vmem:[%s3 + $0x10] sm:$0xff]
    %v62 = vld [vmem:[%s3 + $0x18] sm:$0xff]
    %v63 = vld [vmem:[%s4] sm:$0x1]
    %v65 = vperm.slane %v63, 0
    %vm67 = vcmask 261120
    %v69 = vsel %vm67, %v58, 0
    %71 = vmatpush.msra.mxu0 0.0
    %72 = vmatpush.msra.mxu0 0.0
    %73 = vmatpush.msra.mxu0 0.0
    %74 = vmatpush.msra.mxu0 0.0
    %75 = vmatpush.msra.mxu0 0.0
    %76 = vmatpush.msra.mxu0 0.0
    %77 = vmatpush.msra.mxu0 0.0
    %78 = vmatpush.msra.mxu0 0.0
    %79 = vmatpush.msra.mxu0 0.0
    %80 = vmatpush.msra.mxu0 0.0
    %81 = vmatpush.msra.mxu0 0.0
    %82 = vmatpush.msra.mxu0 0.0
    %83 = vmatpush.msra.mxu0 %v62
    %84 = vmatpush.msra.mxu0 %v61
    %85 = vmatpush.msra.mxu0 %v60
    %86 = vmatpush.msra.mxu0 %v59
    %87 = vmatmul.f32.gmra.mxu0 %v69
    %v88 = vpop.f32.mrf.mxu0
    %v89 = vadd.f32 %v65, %v88
    %90 = vdwg.mxu0
    %91 = vst [vmem:[#allocation2] sm:$0xff] %v89
    // Predicated region
    $region22: #{tpu_custom_call.1} parent=1 // pred_check
      _
    $region23: #{tpu_custom_call.1} parent=1 // pred_check_branch
      %93 = sbr.rel (0) target = $region25
    $region24: #{tpu_custom_call.1} parent=1 // pred_region
      %95 = vsyncadd [#allocation3], 0
      %s97 = sshll.u32 [#allocation2], 4
      %s98 = int_to_ptr.vmem [resolvable:$true] %s97
      %s99 = sshll.u32 %s5, 4
      %s100 = int_to_ptr.hbm [resolvable:$true] %s99
      %102 = dma.vmem_to_hbm [thread:$0]  %s98, 128, %s100, [#allocation3]
    $region25: #{tpu_custom_call.1} parent=1 // pred_fallthru
      _
    // Predicated region
    $region26: #{tpu_custom_call.1} parent=1 // pred_check
      _
    $region27: #{tpu_custom_call.1} parent=1 // pred_check_branch
      %104 = sbr.rel (0) target = $region29
    $region28: #{tpu_custom_call.1} parent=1 // pred_region
      %106 = dma.done [#allocation3], 128
    $region29: #{tpu_custom_call.1} parent=1 // pred_fallthru
      _
    %107 = vsyncpa [#allocation3], 1

</llo_original>
